<compile_context>
chip_gen: v6e
topology: v6e:2x2x1
jax: 0.10.0
libtpu: 0.0.40
codegen_flags: <defaults>
</compile_context>

<pallas_src>
import functools

import jax
import jax.numpy as jnp
from jax.experimental import pallas as pl
from jax.experimental.pallas import tpu as pltpu


def _round_up(n, m):
    return ((n + m - 1) // m) * m


def _add_ln_sublayer_kernel(x_ref, a2_ref, b2_ref, w_ref, wb_ref, o_ref, normed_ref,
                            *, eps, hidden, tn):
    """Grid: (row_tiles, col_tiles).  Row axis parallel, column axis arbitrary.

    x_ref      : (TM, Hp)  full hidden row block (same block for every j)
    a2/b2_ref  : (1,  Hp)  LayerNorm scale / shift (padded cols are zero)
    w_ref      : (Hp, TN)  column tile of the fused Linear weight (mxu dtype)
    wb_ref     : (1,  TN)  column tile of the Linear bias
    o_ref      : (TM, TN)  output column tile
    normed_ref : (TM, Hp)  VMEM scratch, LayerNorm output reused across column tiles
    """
    j = pl.program_id(1)

    # Compute LayerNorm once per row tile, reuse for every weight column tile.
    @pl.when(j == 0)
    def _():
        x = x_ref[...].astype(jnp.float32)                         # (TM, Hp)
        # Single-pass moments over the true hidden size (padded columns are zero).
        s = jnp.sum(x, axis=-1, keepdims=True)                     # (TM, 1)
        sq = jnp.sum(x * x, axis=-1, keepdims=True)                # (TM, 1)
        mean = s * (1.0 / hidden)
        var = jnp.maximum(sq - s * mean, 0.0) * (1.0 / (hidden - 1))  # unbiased (torch.std)
        std = jnp.sqrt(var)
        inv = pl.reciprocal(std + eps, approx=False)               # one recip per row (EUP)
        a2 = a2_ref[...].astype(jnp.float32)
        b2 = b2_ref[...].astype(jnp.float32)
        normed = a2 * ((x - mean) * inv) + b2                      # (TM, Hp)
        normed_ref[...] = normed.astype(normed_ref.dtype)

    # Fused sublayer column tile: Linear(H, H) slice on the MXU.
    sub = jnp.dot(normed_ref[...], w_ref[...], preferred_element_type=jnp.float32)
    sub = sub + wb_ref[...].astype(jnp.float32)                    # (TM, TN)

    # Residual add against the matching columns of x.
    col = pl.multiple_of(j * tn, 128)
    xcol = x_ref[:, pl.ds(col, tn)].astype(jnp.float32)
    o_ref[...] = (xcol + sub).astype(o_ref.dtype)


def add_layer_norm(x, a_2, b_2, w, wb, *, eps=1e-6, tile_rows=256,
                   mxu_dtype=jnp.bfloat16):
    """x: (B, S, H). a_2, b_2: (H,). w: (H, H). wb: (H,). Returns (B, S, H)."""
    B, S, H = x.shape
    rows = B * S

    # Pad hidden dim to a lane-dense multiple of 128; pad rows to the tile multiple.
    Hp = _round_up(H, 128)
    tm = min(tile_rows, _round_up(rows, 8))
    rows_p = _round_up(rows, tm)

    # Column tile for the fused weight (bounds weight VMEM; Hp is a multiple of 128).
    if Hp % 512 == 0:
        tn = 512
    elif Hp % 256 == 0:
        tn = 256
    else:
        tn = 128
    tn = min(tn, Hp)

    x2 = x.reshape(rows, H)
    if rows_p != rows or Hp != H:
        x2 = jnp.pad(x2, ((0, rows_p - rows), (0, Hp - H)))
    a2 = jnp.pad(a_2.astype(jnp.float32), (0, Hp - H)).reshape(1, Hp)
    b2 = jnp.pad(b_2.astype(jnp.float32), (0, Hp - H)).reshape(1, Hp)
    wb2 = jnp.pad(wb.astype(jnp.float32), (0, Hp - H)).reshape(1, Hp)
    wp = jnp.pad(w, ((0, Hp - H), (0, Hp - H))).astype(mxu_dtype)

    kernel = functools.partial(_add_ln_sublayer_kernel, eps=eps, hidden=H, tn=tn)

    out = pl.pallas_call(
        kernel,
        out_shape=jax.ShapeDtypeStruct((rows_p, Hp), x.dtype),
        grid_spec=pltpu.PrefetchScalarGridSpec(
            num_scalar_prefetch=0,
            grid=(rows_p // tm, Hp // tn),
            in_specs=[
                pl.BlockSpec((tm, Hp), lambda i, j: (i, 0)),   # x (full hidden row block)
                pl.BlockSpec((1, Hp), lambda i, j: (0, 0)),    # a_2
                pl.BlockSpec((1, Hp), lambda i, j: (0, 0)),    # b_2
                pl.BlockSpec((Hp, tn), lambda i, j: (0, j)),   # weight column tile
                pl.BlockSpec((1, tn), lambda i, j: (0, j)),    # bias column tile
            ],
            out_specs=pl.BlockSpec((tm, tn), lambda i, j: (i, j)),
            scratch_shapes=[pltpu.VMEM((tm, Hp), mxu_dtype)],  # LayerNorm result, reused over j
        ),
        compiler_params=pltpu.CompilerParams(
            dimension_semantics=("parallel", "arbitrary"),
            vmem_limit_bytes=48 * 1024 * 1024,
        ),
    )(x2, a2, b2, wp, wb2)

    return out[:rows, :H].reshape(B, S, H)


def _reference(x, a_2, b_2, w, wb, eps=1e-6):
    """Pure f32 reference matching the PyTorch module (unbiased std, eps outside sqrt)."""
    xf = x.astype(jnp.float32)
    mean = jnp.mean(xf, axis=-1, keepdims=True)
    var = jnp.sum((xf - mean) ** 2, axis=-1, keepdims=True) / (x.shape[-1] - 1)
    std = jnp.sqrt(var)
    normed = a_2 * (xf - mean) / (std + eps) + b_2
    sub = jnp.dot(normed, w, precision=jax.lax.Precision.HIGHEST) + wb
    return (xf + sub).astype(x.dtype)


if __name__ == "__main__":
    B, S, H = 2, 8, 32
    key = jax.random.PRNGKey(0)
    kx, kw, kb = jax.random.split(key, 3)

    x = jax.random.normal(kx, (B, S, H), dtype=jnp.float32)

    # LayerNorm parameters: a_2 = ones, b_2 = zeros (as in nn.Parameter init).
    a_2 = jnp.ones((H,), dtype=jnp.float32)
    b_2 = jnp.zeros((H,), dtype=jnp.float32)

    # Deterministic fused sublayer (Linear H->H) parameters.
    w = jax.random.normal(kw, (H, H), dtype=jnp.float32) * (1.0 / jnp.sqrt(H))
    wb = jax.random.normal(kb, (H,), dtype=jnp.float32) * 0.01

    out = add_layer_norm(x, a_2, b_2, w, wb)
    out = jax.block_until_ready(out)

    ref = _reference(x, a_2, b_2, w, wb)
    assert out.shape == (B, S, H)
    # Tolerance accounts for bf16 MXU inputs in the fused sublayer matmul.
    err = float(jnp.max(jnp.abs(out - ref)))
    assert jnp.allclose(out, ref, atol=2e-2, rtol=2e-2), f"max abs err = {err}"

    print("KERNEL_OK")
</pallas_src>

<mosaic_0001>
module attributes {stable_mosaic.version = 11 : i64} {
  func.func @_add_ln_sublayer_kernel(%arg0: i32, %arg1: i32, %arg2: memref<16x128xf32, #tpu.memory_space<vmem>>, %arg3: memref<1x128xf32, #tpu.memory_space<vmem>>, %arg4: memref<1x128xf32, #tpu.memory_space<vmem>>, %arg5: memref<128x128xbf16, #tpu.memory_space<vmem>>, %arg6: memref<1x128xf32, #tpu.memory_space<vmem>>, %arg7: memref<16x128xf32, #tpu.memory_space<vmem>>, %arg8: memref<16x128xbf16, #tpu.memory_space<vmem>>) attributes {dimension_semantics = [#tpu.dimension_semantics<parallel>, #tpu.dimension_semantics<arbitrary>], iteration_bounds = array<i64: 1, 1>, scalar_prefetch = 0 : i64, scratch_operands = 1 : i64, tpu.core_type = #tpu.core_type<tc>, window_params = [{transform_indices = @transform_0, window_bounds = array<i64: 16, 128>}, {pipeline_mode = #tpu.pipeline_mode<synchronous>, transform_indices = @transform_1, window_bounds = array<i64: 1, 128>}, {pipeline_mode = #tpu.pipeline_mode<synchronous>, transform_indices = @transform_2, window_bounds = array<i64: 1, 128>}, {transform_indices = @transform_3, window_bounds = array<i64: 128, 128>}, {transform_indices = @transform_4, window_bounds = array<i64: 1, 128>}, {transform_indices = @transform_5, window_bounds = array<i64: 16, 128>}]} {
    %c0_i32 = arith.constant 0 : i32
    %0 = arith.cmpi eq, %arg1, %c0_i32 : i32
    %1 = arith.extui %0 : i1 to i32
    %c0_i32_0 = arith.constant 0 : i32
    %2 = arith.cmpi ne, %1, %c0_i32_0 : i32
    scf.if %2 {
      %c0_9 = arith.constant 0 : index
      %c0_10 = arith.constant 0 : index
      %15 = vector.load %arg2[%c0_9, %c0_10] : memref<16x128xf32, #tpu.memory_space<vmem>>, vector<16x128xf32>
      %cst_11 = arith.constant dense<0.000000e+00> : vector<16xf32>
      %16 = vector.multi_reduction <add>, %15, %cst_11 [1] : vector<16x128xf32> to vector<16xf32>
      %17 = vector.shape_cast %16 : vector<16xf32> to vector<16x1xf32>
      %18 = arith.mulf %15, %15 : vector<16x128xf32>
      %cst_12 = arith.constant dense<0.000000e+00> : vector<16xf32>
      %19 = vector.multi_reduction <add>, %18, %cst_12 [1] : vector<16x128xf32> to vector<16xf32>
      %20 = vector.shape_cast %19 : vector<16xf32> to vector<16x1xf32>
      %cst_13 = arith.constant 3.125000e-02 : f32
      %21 = vector.broadcast %cst_13 : f32 to vector<16x1xf32>
      %22 = arith.mulf %17, %21 : vector<16x1xf32>
      %23 = arith.mulf %17, %22 : vector<16x1xf32>
      %24 = arith.subf %20, %23 : vector<16x1xf32>
      %cst_14 = arith.constant 0.000000e+00 : f32
      %25 = vector.broadcast %cst_14 : f32 to vector<16x1xf32>
      %26 = arith.maximumf %24, %25 : vector<16x1xf32>
      %cst_15 = arith.constant 0.0322580636 : f32
      %27 = vector.broadcast %cst_15 : f32 to vector<16x1xf32>
      %28 = arith.mulf %26, %27 : vector<16x1xf32>
      %29 = math.sqrt %28 : vector<16x1xf32>
      %cst_16 = arith.constant 9.99999997E-7 : f32
      %30 = vector.broadcast %cst_16 : f32 to vector<16x1xf32>
      %31 = arith.addf %29, %30 : vector<16x1xf32>
      %32 = tpu.reciprocal %31 : vector<16x1xf32> -> vector<16x1xf32>
      %c0_17 = arith.constant 0 : index
      %c0_18 = arith.constant 0 : index
      %33 = vector.load %arg3[%c0_17, %c0_18] : memref<1x128xf32, #tpu.memory_space<vmem>>, vector<1x128xf32>
      %c0_19 = arith.constant 0 : index
      %c0_20 = arith.constant 0 : index
      %34 = vector.load %arg4[%c0_19, %c0_20] : memref<1x128xf32, #tpu.memory_space<vmem>>, vector<1x128xf32>
      %35 = vector.broadcast %22 : vector<16x1xf32> to vector<16x128xf32>
      %36 = arith.subf %15, %35 : vector<16x128xf32>
      %37 = vector.broadcast %32 : vector<16x1xf32> to vector<16x128xf32>
      %38 = arith.mulf %36, %37 : vector<16x128xf32>
      %39 = vector.broadcast %33 : vector<1x128xf32> to vector<16x128xf32>
      %40 = arith.mulf %39, %38 : vector<16x128xf32>
      %41 = vector.broadcast %34 : vector<1x128xf32> to vector<16x128xf32>
      %42 = arith.addf %40, %41 : vector<16x128xf32>
      %43 = arith.truncf %42 : vector<16x128xf32> to vector<16x128xbf16>
      %c0_21 = arith.constant 0 : index
      %c0_22 = arith.constant 0 : index
      %44 = vector.load %arg8[%c0_21, %c0_22] : memref<16x128xbf16, #tpu.memory_space<vmem>>, vector<16x128xbf16>
      tpu.vector_store %arg8[%c0_21, %c0_22], %43 {strides = array<i32>} : memref<16x128xbf16, #tpu.memory_space<vmem>>, vector<16x128xbf16>,
    } else {
    }
    %c0 = arith.constant 0 : index
    %c0_1 = arith.constant 0 : index
    %3 = vector.load %arg8[%c0, %c0_1] : memref<16x128xbf16, #tpu.memory_space<vmem>>, vector<16x128xbf16>
    %c0_2 = arith.constant 0 : index
    %c0_3 = arith.constant 0 : index
    %4 = vector.load %arg5[%c0_2, %c0_3] : memref<128x128xbf16, #tpu.memory_space<vmem>>, vector<128x128xbf16>
    %cst = arith.constant dense<0.000000e+00> : vector<16x128xf32>
    %5 = tpu.matmul %3, %4, %cst {dimension_numbers = #tpu.dot_dimension_numbers<[1], [0], [0], [1], [0, 0, 1, 1], [], []>} : vector<16x128xbf16>, vector<128x128xbf16>, vector<16x128xf32> -> vector<16x128xf32>
    %c0_4 = arith.constant 0 : index
    %c0_5 = arith.constant 0 : index
    %6 = vector.load %arg6[%c0_4, %c0_5] : memref<1x128xf32, #tpu.memory_space<vmem>>, vector<1x128xf32>
    %7 = vector.broadcast %6 : vector<1x128xf32> to vector<16x128xf32>
    %8 = arith.addf %5, %7 : vector<16x128xf32>
    %c128_i32 = arith.constant 128 : i32
    %9 = arith.muli %arg1, %c128_i32 : i32
    %10 = tpu.assume_multiple %9, 128 : i32
    %c0_6 = arith.constant 0 : index
    %11 = arith.index_cast %10 : i32 to index
    %12 = vector.load %arg2[%c0_6, %11] : memref<16x128xf32, #tpu.memory_space<vmem>>, vector<16x128xf32>
    %13 = arith.addf %12, %8 : vector<16x128xf32>
    %c0_7 = arith.constant 0 : index
    %c0_8 = arith.constant 0 : index
    %14 = vector.load %arg7[%c0_7, %c0_8] : memref<16x128xf32, #tpu.memory_space<vmem>>, vector<16x128xf32>
    tpu.vector_store %arg7[%c0_7, %c0_8], %13 {strides = array<i32>} : memref<16x128xf32, #tpu.memory_space<vmem>>, vector<16x128xf32>,
    return
  }
  func.func @transform_0(%arg0: i32, %arg1: i32) -> (i32, i32) {
    %c0_i32 = arith.constant 0 : i32
    %c0_i32_0 = arith.constant 0 : i32
    return %arg0, %c0_i32 : i32, i32
  }
  func.func @transform_1(%arg0: i32, %arg1: i32) -> (i32, i32) {
    %c0_i32 = arith.constant 0 : i32
    %c0_i32_0 = arith.constant 0 : i32
    %c0_i32_1 = arith.constant 0 : i32
    return %c0_i32, %c0_i32_0 : i32, i32
  }
  func.func @transform_2(%arg0: i32, %arg1: i32) -> (i32, i32) {
    %c0_i32 = arith.constant 0 : i32
    %c0_i32_0 = arith.constant 0 : i32
    %c0_i32_1 = arith.constant 0 : i32
    return %c0_i32, %c0_i32_0 : i32, i32
  }
  func.func @transform_3(%arg0: i32, %arg1: i32) -> (i32, i32) {
    %c0_i32 = arith.constant 0 : i32
    %c0_i32_0 = arith.constant 0 : i32
    return %c0_i32, %arg1 : i32, i32
  }
  func.func @transform_4(%arg0: i32, %arg1: i32) -> (i32, i32) {
    %c0_i32 = arith.constant 0 : i32
    %c0_i32_0 = arith.constant 0 : i32
    return %c0_i32, %arg1 : i32, i32
  }
  func.func @transform_5(%arg0: i32, %arg1: i32) -> (i32, i32) {
    %c0_i32 = arith.constant 0 : i32
    return %arg0, %arg1 : i32, i32
  }
}

</mosaic_0001>

<llo_original>
// kernel: tpu_custom_call.1
$region0: #{tpu_custom_call.1}
  #allocation0 [shape = 'u32[]', space=smem, size = 0x4, offset = 0x4, fixed_abs, tag = 'smem constant byte address 0x4 - core index']
  #allocation1 [shape = 'u32[144,128]{1,0:T(1,128)}', space=vmem, size = 0x12000, scoped, tag = 'internal scratch']
  #allocation2 [shape = 'bf16[16,128]{1,0:T(8,128)(2,1)}', space=vmem, size = 0x1000, scoped, tag = 'scratch operand']
  %s0 = inlined_call_operand.hbm [shape: f32[16,128], index: 0, kind: input, shape index: {}]
  %s1 = inlined_call_operand.vmem [shape: f32[1,128], index: 1, kind: input, shape index: {}]
  %s2 = inlined_call_operand.vmem [shape: f32[1,128], index: 2, kind: input, shape index: {}]
  %s3 = inlined_call_operand.hbm [shape: bf16[128,128], index: 3, kind: input, shape index: {}]
  %s4 = inlined_call_operand.vmem [shape: f32[1,128], index: 4, kind: input, shape index: {}]
  %s5 = inlined_call_operand.hbm [shape: f32[16,128], index: 5, kind: output, shape index: {}]
  %s6 = sld [smem:[#allocation0]]
  $region42: #{tpu_custom_call.1} parent=0
    _
  %s8 = ssub.s32 1, %s6
  %s9 = scalar_select 0, %s8, %s6
  $region1: #{tpu_custom_call.1} parent=0
    #allocation3 [shape = 'u8[8192]{0}', space=vmem, size = 0x2000, scoped, tag = 'input window, operand 0, single buffered']
    #allocation4 [shape = 's32[1]{0}', space=sflag, size = 0x4, scoped, tag = 'scoped memory for tpu_custom_call.1']
    #allocation5 [shape = 's32[1]{0}', space=sflag, size = 0x4, scoped, tag = 'scoped memory for tpu_custom_call.1']
    #allocation6 [shape = 'u8[32768]{0}', space=vmem, size = 0x8000, scoped, tag = 'input window, operand 3, single buffered']
    #allocation7 [shape = 's32[1]{0}', space=sflag, size = 0x4, scoped, tag = 'scoped memory for tpu_custom_call.1']
    #allocation8 [shape = 'u8[8192]{0}', space=vmem, size = 0x2000, scoped, tag = 'output window, operand 0, single buffered']
    %10 = vsyncpa [#allocation4], 0
    %11 = vsyncpa [#allocation7], 0
    %12 = vsyncpa [#allocation5], 0
    // Predicated region
    $region2: #{tpu_custom_call.1} parent=1 // pred_check
      _
    $region3: #{tpu_custom_call.1} parent=1 // pred_check_branch
      %14 = sbr.rel (0) target = $region5
    $region4: #{tpu_custom_call.1} parent=1 // pred_region
      %s16 = ssub.s32 256, 256
      %17 = vsyncadd [#allocation4], %s16
      %s18 = sshll.u32 [#allocation3], 4
      %s19 = int_to_ptr.vmem [resolvable:$true] %s18
      %24 = dma.hbm_to_vmem [thread:$0]  %s0, 256, %s19, [#allocation4], 128, 128, 8
    $region5: #{tpu_custom_call.1} parent=1 // pred_fallthru
      _
    // Predicated region
    $region6: #{tpu_custom_call.1} parent=1 // pred_check
      _
    $region7: #{tpu_custom_call.1} parent=1 // pred_check_branch
      %26 = sbr.rel (0) target = $region9
    $region8: #{tpu_custom_call.1} parent=1 // pred_region
      _
    $region9: #{tpu_custom_call.1} parent=1 // pred_fallthru
      _
    // Predicated region
    $region10: #{tpu_custom_call.1} parent=1 // pred_check
      _
    $region11: #{tpu_custom_call.1} parent=1 // pred_check_branch
      %28 = sbr.rel (0) target = $region13
    $region12: #{tpu_custom_call.1} parent=1 // pred_region
      _
    $region13: #{tpu_custom_call.1} parent=1 // pred_fallthru
      _
    // Predicated region
    $region14: #{tpu_custom_call.1} parent=1 // pred_check
      _
    $region15: #{tpu_custom_call.1} parent=1 // pred_check_branch
      %30 = sbr.rel (0) target = $region17
    $region16: #{tpu_custom_call.1} parent=1 // pred_region
      %s32 = ssub.s32 1024, 1024
      %33 = vsyncadd [#allocation7], %s32
      %s34 = sshll.u32 [#allocation6], 4
      %s35 = int_to_ptr.vmem [resolvable:$true] %s34
      %40 = dma.hbm_to_vmem [thread:$0]  %s3, 1024, %s35, [#allocation7], 64, 64, 4
    $region17: #{tpu_custom_call.1} parent=1 // pred_fallthru
      _
    // Predicated region
    $region18: #{tpu_custom_call.1} parent=1 // pred_check
      _
    $region19: #{tpu_custom_call.1} parent=1 // pred_check_branch
      %42 = sbr.rel (0) target = $region21
    $region20: #{tpu_custom_call.1} parent=1 // pred_region
      _
    $region21: #{tpu_custom_call.1} parent=1 // pred_fallthru
      _
    // Predicated region
    $region22: #{tpu_custom_call.1} parent=1 // pred_check
      _
    $region23: #{tpu_custom_call.1} parent=1 // pred_check_branch
      %44 = sbr.rel (0) target = $region25
    $region24: #{tpu_custom_call.1} parent=1 // pred_region
      %45 = dma.done [#allocation4], 256
    $region25: #{tpu_custom_call.1} parent=1 // pred_fallthru
      _
    // Predicated region
    $region26: #{tpu_custom_call.1} parent=1 // pred_check
      _
    $region27: #{tpu_custom_call.1} parent=1 // pred_check_branch
      %47 = sbr.rel (0) target = $region29
    $region28: #{tpu_custom_call.1} parent=1 // pred_region
      %48 = dma.done [#allocation7], 1024
    $region29: #{tpu_custom_call.1} parent=1 // pred_fallthru
      _
    %p50 = scmp.eq.s32.totalorder 0, 0
    // Predicated region
    $region30: #{tpu_custom_call.1} parent=1 // pred_check
      %p51 = pneg %p50
    $region31: #{tpu_custom_call.1} parent=1 // pred_check_branch
      %53 = sbr.rel (%p51) target = $region33
    $region32: #{tpu_custom_call.1} parent=1 // pred_region
      %v54 = vld [vmem:[#allocation3] sm:$0xff]
      %v55 = vld [vmem:[#allocation3 + $0x8] sm:$0xff]
      %56 = vadd.xlane.f32.xlu0 %v54
      %v57 = vpop.xlane.xlu0 %56
      %58 = vadd.xlane.f32.xlu0 %v55
      %v59 = vpop.xlane.xlu0 %58
      %v60 = vmul.f32 %v54, %v54
      %v61 = vmul.f32 %v55, %v55
      %62 = vadd.xlane.f32.xlu0 %v60
      %v63 = vpop.xlane.xlu0 %62
      %64 = vadd.xlane.f32.xlu0 %v61
      %v65 = vpop.xlane.xlu0 %64
      %v66 = vmul.f32 %v57, 0.03125
      %v67 = vmul.f32 %v59, 0.03125
      %v68 = vmul.f32 %v57, %v66
      %v69 = vmul.f32 %v59, %v67
      %v70 = vsub.f32 %v63, %v68
      %v71 = vsub.f32 %v65, %v69
      %v72 = vmax.f32 %v70, 0.0
      %v73 = vmax.f32 %v71, 0.0
      %v74 = vmul.f32 %v72, 0.032258064
      %v75 = vmul.f32 %v73, 0.032258064
      %v76 = vrsqrt.pop %v74
      %v77 = vmul.f32 %v74, %v76
      %vm78 = vcmp.eq.f32.partialorder %v74, inf
      %v79 = vsel %vm78, %v74, %v77
      %vm80 = vcmp.eq.f32.partialorder %v74, 0.0
      %v81 = vand.u32 %v74, 2147483648
      %v82 = vsel %vm80, %v81, %v79
      %v83 = vrsqrt.pop %v75
      %v84 = vmul.f32 %v75, %v83
      %vm85 = vcmp.eq.f32.partialorder %v75, inf
      %v86 = vsel %vm85, %v75, %v84
      %vm87 = vcmp.eq.f32.partialorder %v75, 0.0
      %v88 = vand.u32 %v75, 2147483648
      %v89 = vsel %vm87, %v88, %v86
      %v90 = vadd.f32 %v82, 1e-06
      %v91 = vadd.f32 %v89, 1e-06
      %v92 = vrcp.pop %v90
      %v93 = vrcp.pop %v91
      %v94 = vld [vmem:[%s1] sm:$0x1]
      %v95 = vld [vmem:[%s2] sm:$0x1]
      %v96 = vsub.f32 %v54, %v66
      %v97 = vsub.f32 %v55, %v67
      %v98 = vmul.f32 %v96, %v92
      %v99 = vmul.f32 %v97, %v93
      %v101 = vlaneseq
      %v102 = vshrl.u32 %v101, 7
      %v103 = vsub.s32 0, %v102
      %v104 = vrot.slane %v94, %v103
      %v106 = vmul.f32 %v104, %v98
      %v107 = vmul.f32 %v104, %v99
      %v109 = vlaneseq
      %v110 = vshrl.u32 %v109, 7
      %v111 = vsub.s32 0, %v110
      %v112 = vrot.slane %v95, %v111
      %v114 = vadd.f32 %v106, %v112
      %v115 = vadd.f32 %v107, %v112
      %v116 = vpack.c.bf16 %v115, %v114
      %v118 = vunpack.c.l.b16 %v116
      %v119 = vunpack.c.h.b16 %v116
      %v120 = vpack.c.b16 %v118, %v118
      %v121 = vpack.c.b16 %v119, %v119
      %124 = vst [vmem:[#allocation2] sm:$0xf] %v120
      %125 = vst [vmem:[#allocation2 + $0x4] sm:$0xf] %v121
    $region33: #{tpu_custom_call.1} parent=1 // pred_fallthru
      _
    %v126 = vld [vmem:[#allocation2] sm:$0xf]
    %v127 = vld [vmem:[#allocation2 + $0x4] sm:$0xf]
    %v128 = vld [vmem:[#allocation6] sm:$0xf]
    %v129 = vld [vmem:[#allocation6 + $0x4] sm:$0xf]
    %v130 = vld [vmem:[#allocation6 + $0x8] sm:$0xf]
    %v131 = vld [vmem:[#allocation6 + $0xc] sm:$0xf]
    %v132 = vld [vmem:[#allocation6 + $0x10] sm:$0xf]
    %v133 = vld [vmem:[#allocation6 + $0x14] sm:$0xf]
    %v134 = vld [vmem:[#allocation6 + $0x18] sm:$0xf]
    %v135 = vld [vmem:[#allocation6 + $0x1c] sm:$0xf]
    %v136 = vld [vmem:[#allocation6 + $0x20] sm:$0xf]
    %v137 = vld [vmem:[#allocation6 + $0x24] sm:$0xf]
    %v138 = vld [vmem:[#allocation6 + $0x28] sm:$0xf]
    %v139 = vld [vmem:[#allocation6 + $0x2c] sm:$0xf]
    %v140 = vld [vmem:[#allocation6 + $0x30] sm:$0xf]
    %v141 = vld [vmem:[#allocation6 + $0x34] sm:$0xf]
    %v142 = vld [vmem:[#allocation6 + $0x38] sm:$0xf]
    %v143 = vld [vmem:[#allocation6 + $0x3c] sm:$0xf]
    %v144 = vld [vmem:[%s4] sm:$0x1]
    %v146 = vlaneseq
    %v147 = vshrl.u32 %v146, 7
    %v148 = vsub.s32 0, %v147
    %v149 = vrot.slane %v144, %v148
    %v153 = vunpack.c.l.b16 %v126
    %v154 = vunpack.c.l.b16 %v127
    %v155 = vpack.c.b16 %v154, %v153
    %v173 = vunpack.c.l.b16 %v128
    %v174 = vunpack.c.l.b16 %v129
    %v175 = vunpack.c.l.b16 %v130
    %v176 = vunpack.c.l.b16 %v131
    %v177 = vunpack.c.l.b16 %v132
    %v178 = vunpack.c.l.b16 %v133
    %v179 = vunpack.c.l.b16 %v134
    %v180 = vunpack.c.l.b16 %v135
    %v181 = vunpack.c.l.b16 %v136
    %v182 = vunpack.c.l.b16 %v137
    %v183 = vunpack.c.l.b16 %v138
    %v184 = vunpack.c.l.b16 %v139
    %v185 = vunpack.c.l.b16 %v140
    %v186 = vunpack.c.l.b16 %v141
    %v187 = vunpack.c.l.b16 %v142
    %v188 = vunpack.c.l.b16 %v143
    %v189 = vpack.c.b16 %v174, %v173
    %v190 = vpack.c.b16 %v176, %v175
    %v191 = vpack.c.b16 %v178, %v177
    %v192 = vpack.c.b16 %v180, %v179
    %v193 = vpack.c.b16 %v182, %v181
    %v194 = vpack.c.b16 %v184, %v183
    %v195 = vpack.c.b16 %v186, %v185
    %v196 = vpack.c.b16 %v188, %v187
    %205 = vmatprep.subr.bf16.mxu0 0
    %206 = vmatpush1.bf16.msra.mxu0 %v196
    %207 = vmatprep.subr.bf16.mxu0 0
    %208 = vmatpush1.bf16.msra.mxu0 %v195
    %209 = vmatprep.subr.bf16.mxu0 0
    %210 = vmatpush1.bf16.msra.mxu0 %v194
    %211 = vmatprep.subr.bf16.mxu0 0
    %212 = vmatpush1.bf16.msra.mxu0 %v193
    %213 = vmatprep.subr.bf16.mxu0 0
    %214 = vmatpush1.bf16.msra.mxu0 %v192
    %215 = vmatprep.subr.bf16.mxu0 0
    %216 = vmatpush1.bf16.msra.mxu0 %v191
    %217 = vmatprep.subr.bf16.mxu0 0
    %218 = vmatpush1.bf16.msra.mxu0 %v190
    %219 = vmatprep.subr.bf16.mxu0 0
    %220 = vmatpush1.bf16.msra.mxu0 %v189
    %221 = vmatprep.subr.bf16.mxu0 0
    %222 = vmatpush2.bf16.msra.mxu0 0
    %223 = vmatprep.subr.bf16.mxu0 0
    %224 = vmatpush2.bf16.msra.mxu0 0
    %225 = vmatprep.subr.bf16.mxu0 0
    %226 = vmatpush2.bf16.msra.mxu0 0
    %227 = vmatprep.subr.bf16.mxu0 0
    %228 = vmatpush2.bf16.msra.mxu0 0
    %229 = vmatprep.subr.bf16.mxu0 0
    %230 = vmatpush2.bf16.msra.mxu0 0
    %231 = vmatprep.subr.bf16.mxu0 0
    %232 = vmatpush2.bf16.msra.mxu0 0
    %233 = vmatprep.subr.bf16.mxu0 0
    %234 = vmatpush2.bf16.msra.mxu0 0
    %235 = vmatprep.subr.bf16.mxu0 0
    %236 = vmatpush2.bf16.msra.mxu0 0
    %237 = vmatprep.mubr.bf16.mxu0 0
    %238 = vmatmul.mubr.bf16.gmra.mxu0 %v155
    %v239 = vpop.f32.mrf.mxu0
    %v240 = vadd.f32 %v149, %v239
    %v241 = vpop.f32.mrf.mxu0
    %v242 = vpop.f32.mrf.mxu0
    %v243 = vadd.f32 %v149, %v242
    %v244 = vpop.f32.mrf.mxu0
    %245 = vdwg.mxu0
    %s246 = smul.u32 0, 128
    %s247 = sshra.s32 %s246, 7
    %s248 = sand.u32 %s246, 127
    %s249 = scalar_lea.vmem [#allocation3], %s247
    %v250 = vld [vmem:[%s249] sm:$0xff]
    %v251 = vld [vmem:[%s249 + $0x8] sm:$0xff]
    %v252 = vadd.f32 %v250, %v240
    %v253 = vadd.f32 %v251, %v243
    %254 = vst [vmem:[#allocation8] sm:$0xff] %v252
    %255 = vst [vmem:[#allocation8 + $0x8] sm:$0xff] %v253
    // Predicated region
    $region34: #{tpu_custom_call.1} parent=1 // pred_check
      _
    $region35: #{tpu_custom_call.1} parent=1 // pred_check_branch
      %257 = sbr.rel (0) target = $region37
    $region36: #{tpu_custom_call.1} parent=1 // pred_region
      %s259 = ssub.s32 256, 256
      %260 = vsyncadd [#allocation5], %s259
      %s261 = sshll.u32 [#allocation8], 4
      %s262 = int_to_ptr.vmem [resolvable:$true] %s261
      %267 = dma.vmem_to_hbm [thread:$0]  %s262, 256, %s5, [#allocation5], 128, 128, 8
    $region37: #{tpu_custom_call.1} parent=1 // pred_fallthru
      _
    // Predicated region
    $region38: #{tpu_custom_call.1} parent=1 // pred_check
      _
    $region39: #{tpu_custom_call.1} parent=1 // pred_check_branch
      %269 = sbr.rel (0) target = $region41
    $region40: #{tpu_custom_call.1} parent=1 // pred_region
      %270 = dma.done [#allocation5], 256
    $region41: #{tpu_custom_call.1} parent=1 // pred_fallthru
      _
    %271 = vsyncpa [#allocation4], 1
    %272 = vsyncpa [#allocation7], 1
    %273 = vsyncpa [#allocation5], 1

</llo_original>
